<compile_context>
chip_gen: v7x
topology: tpu7x:2x2x1
jax: 0.10.0
libtpu: 0.0.40
codegen_flags: <defaults>
</compile_context>

<pallas_src>
import functools

import jax
import jax.numpy as jnp
from jax.experimental import pallas as pl
from jax.experimental.pallas import tpu as pltpu

LANES = 128


def _charbonnier_kernel(x_ref, y_ref, o_ref, *, eps, bm, nblocks, inner,
                        valid_rows_last):
    p = pl.program_id(0)      # partition (parallel axis, TC-shardable)
    i = pl.program_id(1)      # inner step (arbitrary / reduction axis)
    g = p * inner + i         # global block id this step maps to (index_map clamps)

    @pl.when(i == 0)
    def _():
        o_ref[...] = jnp.zeros_like(o_ref)

    def _compute():
        dx = x_ref[...].astype(jnp.float32) - y_ref[...].astype(jnp.float32)
        return jnp.sqrt(dx * dx + jnp.float32(eps * eps))

    def _accumulate(v):
        if bm % 8 == 0:
            # Pure VALU: fold the (bm//8) vregs of this tile into the resident
            # (8,128) output block; no cross-lane/sublane work in the hot loop.
            o_ref[...] += v.reshape(bm // 8, 8, LANES).sum(axis=0)
        else:
            # Tiny single-block case only (rows < 8); perf irrelevant here.
            o_ref[0:1, :] += jnp.sum(v, axis=0, keepdims=True)

    if valid_rows_last == bm:
        # Block shape divides the row count: no garbage rows -> no masking.
        @pl.when(g < nblocks)
        def _():
            _accumulate(_compute())
    else:
        # Only the final global block is partial; mask just that one.
        @pl.when(g < nblocks - 1)
        def _():
            _accumulate(_compute())

        @pl.when(g == nblocks - 1)
        def _():
            val = _compute()
            rid = jax.lax.broadcasted_iota(jnp.int32, val.shape, 0)
            # Keep the where AFTER sqrt: NaN in the unselected branch does not
            # propagate.  Do not "optimize" this into a multiply-by-mask.
            _accumulate(jnp.where(rid < valid_rows_last, val, jnp.float32(0.0)))


def charbonnier_loss(x, y, eps=1e-3, block_rows=None):
    """mean(sqrt((x - y)^2 + eps^2)) over all elements, computed on TPU."""
    assert x.shape == y.shape, (x.shape, y.shape)
    assert x.dtype == y.dtype, (x.dtype, y.dtype)
    n_valid = int(x.size)
    assert n_valid > 0

    itemsize = jnp.dtype(x.dtype).itemsize
    if block_rows is None:
        # ~2 MiB per input buffer regardless of dtype width (x2 rows for
        # 16-bit inputs); 2 inputs x 2 buffers x 2 MiB = 8 MiB total, within
        # the default scoped VMEM on v5e (16 MiB) / v6e / v7x (32 MiB).
        block_rows = 4096 * (2 if itemsize <= 2 else 1)
    block_rows = int(block_rows)
    if block_rows >= 32:
        # Multiple of 32 keeps bf16 (16,128) / int8 (32,128) native packing.
        block_rows = (block_rows // 32) * 32
    else:
        block_rows = max(8, (block_rows // 8) * 8)

    eps2 = jnp.float32(float(eps) * float(eps))
    xf = x.reshape(-1)
    yf = y.reshape(-1)

    rows = n_valid // LANES
    rem = n_valid - rows * LANES

    # Ragged tail (< 128 elements): plain JAX in the wrapper, no padded copy
    # of the full inputs.
    if rem:
        xt = xf[rows * LANES:].astype(jnp.float32)
        yt = yf[rows * LANES:].astype(jnp.float32)
        dt = xt - yt
        tail_sum = jnp.sum(jnp.sqrt(dt * dt + eps2))
    else:
        tail_sum = jnp.float32(0.0)

    if rows == 0:
        # Entire input is smaller than one lane row.
        return tail_sum / jnp.float32(n_valid)

    # 128-aligned prefix (whole array when rem == 0 -> zero-copy reshape).
    if rem:
        xm = xf[:rows * LANES]
        ym = yf[:rows * LANES]
    else:
        xm = xf
        ym = yf
    x2 = xm.reshape(rows, LANES)
    y2 = ym.reshape(rows, LANES)

    # Tile size: as large as possible, multiple of 8 rows (except the tiny
    # rows<8 single-block case, where block == full array dim is allowed).
    if rows < 8:
        bm = rows
    else:
        bm = min(block_rows, (rows // 8) * 8)
    nblocks = pl.cdiv(rows, bm)
    valid_rows_last = rows - (nblocks - 1) * bm

    # Shard the stream across TensorCores when there is enough work.  v7x has
    # 2 TCs (parallel axis -> ~2x HBM BW); on single-TC v5e/v6e the extra
    # partition just runs sequentially with negligible overhead.
    P = 2 if nblocks >= 8 else 1
    inner = pl.cdiv(nblocks, P)

    kernel = functools.partial(
        _charbonnier_kernel,
        eps=float(eps),
        bm=int(bm),
        nblocks=int(nblocks),
        inner=int(inner),
        valid_rows_last=int(valid_rows_last),
    )

    def in_map(p, i):
        # Clamp: virtual blocks past nblocks-1 re-read the last valid block
        # (skipped inside the kernel via pl.when) -- at most P-1 per call.
        return (jnp.minimum(p * inner + i, nblocks - 1), 0)

    n_main = rows * LANES
    cost = pl.CostEstimate(
        flops=4 * n_main,
        transcendentals=n_main,
        bytes_accessed=2 * n_main * itemsize + P * 8 * LANES * 4,
    )

    partials = pl.pallas_call(
        kernel,
        out_shape=jax.ShapeDtypeStruct((P * 8, LANES), jnp.float32),
        grid_spec=pltpu.PrefetchScalarGridSpec(
            num_scalar_prefetch=0,
            grid=(P, inner),
            in_specs=[
                pl.BlockSpec((bm, LANES), in_map),
                pl.BlockSpec((bm, LANES), in_map),
            ],
            out_specs=pl.BlockSpec((8, LANES), lambda p, i: (p, 0)),
        ),
        compiler_params=pltpu.CompilerParams(
            dimension_semantics=("parallel", "arbitrary"),
        ),
        cost_estimate=cost,
    )(x2, y2)

    return (jnp.sum(partials) + tail_sum) / jnp.float32(n_valid)


if __name__ == "__main__":
    key = jax.random.PRNGKey(0)
    eps = 1e-3

    def ref_loss(a, b):
        d = a.astype(jnp.float32) - b.astype(jnp.float32)
        return jnp.mean(jnp.sqrt(d * d + jnp.float32(eps * eps)))

    def check(shape, dtype=jnp.float32, block_rows=None, rtol=1e-4, atol=1e-6):
        global key
        key, k1, k2 = jax.random.split(key, 3)
        a = jax.random.normal(k1, shape, dtype=jnp.float32).astype(dtype)
        b = jax.random.normal(k2, shape, dtype=jnp.float32).astype(dtype)
        out = jax.block_until_ready(
            charbonnier_loss(a, b, eps=eps, block_rows=block_rows))
        ref = ref_loss(a, b)
        assert jnp.allclose(out, ref, rtol=rtol, atol=atol), (shape, out, ref)

    # 1) NCHW inputs (PyTorch-module convention), numel % 128 == 0 ->
    #    zero-copy fast path, single tile.
    check((2, 4, 16, 16))
    # 2) Unaligned element count -> ragged tail handled in the wrapper,
    #    plus a masked partial last block in the kernel.
    check((2, 3, 17, 19))
    # 3) Multi-step grid, full blocks only.
    check((3, 8, 8, 16), block_rows=8)
    # 4) Enough blocks to trigger the 2-partition (dual-TC) path, even split.
    check((2, 4, 32, 64), block_rows=8)
    # 5) 2-partition path with an odd block count -> clamped/skipped block.
    check((2, 4, 32, 36), block_rows=8)
    # 6) bf16 inputs: half-width HBM stream, in-kernel f32 compute.
    check((2, 4, 16, 16), dtype=jnp.bfloat16, rtol=1e-3, atol=1e-5)
    # 7) Tiny input (< 128 elements): pure wrapper tail path.
    check((2, 3, 7))

    print("KERNEL_OK")
</pallas_src>

<mosaic_0001>
module attributes {stable_mosaic.version = 11 : i64} {
  func.func @_charbonnier_kernel(%arg0: i32, %arg1: i32, %arg2: memref<16x128xf32, #tpu.memory_space<vmem>>, %arg3: memref<16x128xf32, #tpu.memory_space<vmem>>, %arg4: memref<8x128xf32, #tpu.memory_space<vmem>>) attributes {dimension_semantics = [#tpu.dimension_semantics<parallel>, #tpu.dimension_semantics<arbitrary>], iteration_bounds = array<i64: 1, 1>, scalar_prefetch = 0 : i64, scratch_operands = 0 : i64, tpu.core_type = #tpu.core_type<tc>, window_params = [{transform_indices = @transform_0, window_bounds = array<i64: 16, 128>}, {transform_indices = @transform_1, window_bounds = array<i64: 16, 128>}, {transform_indices = @transform_2, window_bounds = array<i64: 8, 128>}]} {
    %c1_i32 = arith.constant 1 : i32
    %0 = arith.muli %arg0, %c1_i32 : i32
    %1 = arith.addi %0, %arg1 : i32
    %c0_i32 = arith.constant 0 : i32
    %2 = arith.cmpi eq, %arg1, %c0_i32 : i32
    %3 = arith.extui %2 : i1 to i32
    %c0_i32_0 = arith.constant 0 : i32
    %4 = arith.cmpi ne, %3, %c0_i32_0 : i32
    scf.if %4 {
      %cst = arith.constant 0.000000e+00 : f32
      %8 = vector.broadcast %cst : f32 to vector<8x128xf32>
      %c0 = arith.constant 0 : index
      %c0_3 = arith.constant 0 : index
      %9 = vector.load %arg4[%c0, %c0_3] : memref<8x128xf32, #tpu.memory_space<vmem>>, vector<8x128xf32>
      tpu.vector_store %arg4[%c0, %c0_3], %8 {strides = array<i32>} : memref<8x128xf32, #tpu.memory_space<vmem>>, vector<8x128xf32>,
    } else {
    }
    %c1_i32_1 = arith.constant 1 : i32
    %5 = arith.cmpi slt, %1, %c1_i32_1 : i32
    %6 = arith.extui %5 : i1 to i32
    %c0_i32_2 = arith.constant 0 : i32
    %7 = arith.cmpi ne, %6, %c0_i32_2 : i32
    scf.if %7 {
      %c0 = arith.constant 0 : index
      %c0_3 = arith.constant 0 : index
      %8 = vector.load %arg2[%c0, %c0_3] : memref<16x128xf32, #tpu.memory_space<vmem>>, vector<16x128xf32>
      %c0_4 = arith.constant 0 : index
      %c0_5 = arith.constant 0 : index
      %9 = vector.load %arg3[%c0_4, %c0_5] : memref<16x128xf32, #tpu.memory_space<vmem>>, vector<16x128xf32>
      %10 = arith.subf %8, %9 : vector<16x128xf32>
      %11 = arith.mulf %10, %10 : vector<16x128xf32>
      %cst = arith.constant 9.99999997E-7 : f32
      %12 = vector.broadcast %cst : f32 to vector<16x128xf32>
      %13 = arith.addf %11, %12 : vector<16x128xf32>
      %14 = math.sqrt %13 : vector<16x128xf32>
      %c0_6 = arith.constant 0 : index
      %c0_7 = arith.constant 0 : index
      %15 = vector.load %arg4[%c0_6, %c0_7] : memref<8x128xf32, #tpu.memory_space<vmem>>, vector<8x128xf32>
      %16 = vector.shape_cast %14 : vector<16x128xf32> to vector<2x8x128xf32>
      %cst_8 = arith.constant dense<0.000000e+00> : vector<8x128xf32>
      %17 = vector.multi_reduction <add>, %16, %cst_8 [0] : vector<2x8x128xf32> to vector<8x128xf32>
      %18 = arith.addf %15, %17 : vector<8x128xf32>
      %c0_9 = arith.constant 0 : index
      %c0_10 = arith.constant 0 : index
      %19 = vector.load %arg4[%c0_9, %c0_10] : memref<8x128xf32, #tpu.memory_space<vmem>>, vector<8x128xf32>
      tpu.vector_store %arg4[%c0_9, %c0_10], %18 {strides = array<i32>} : memref<8x128xf32, #tpu.memory_space<vmem>>, vector<8x128xf32>,
    } else {
    }
    return
  }
  func.func @transform_0(%arg0: i32, %arg1: i32) -> (i32, i32) {
    %c1_i32 = arith.constant 1 : i32
    %0 = arith.muli %arg0, %c1_i32 : i32
    %1 = arith.addi %0, %arg1 : i32
    %c0_i32 = arith.constant 0 : i32
    %2 = arith.minsi %1, %c0_i32 : i32
    %c0_i32_0 = arith.constant 0 : i32
    %c0_i32_1 = arith.constant 0 : i32
    return %2, %c0_i32_0 : i32, i32
  }
  func.func @transform_1(%arg0: i32, %arg1: i32) -> (i32, i32) {
    %c1_i32 = arith.constant 1 : i32
    %0 = arith.muli %arg0, %c1_i32 : i32
    %1 = arith.addi %0, %arg1 : i32
    %c0_i32 = arith.constant 0 : i32
    %2 = arith.minsi %1, %c0_i32 : i32
    %c0_i32_0 = arith.constant 0 : i32
    %c0_i32_1 = arith.constant 0 : i32
    return %2, %c0_i32_0 : i32, i32
  }
  func.func @transform_2(%arg0: i32, %arg1: i32) -> (i32, i32) {
    %c0_i32 = arith.constant 0 : i32
    %c0_i32_0 = arith.constant 0 : i32
    return %arg0, %c0_i32 : i32, i32
  }
}

</mosaic_0001>

<llo_original>
// kernel: tpu_custom_call.1
$region0: #{tpu_custom_call.1}
  #allocation0 [shape = 'u32[]', space=smem, size = 0x4, offset = 0x4, fixed_abs, tag = 'smem constant byte address 0x4 - core index']
  #allocation1 [shape = 'u32[144,128]{1,0:T(1,128)}', space=vmem, size = 0x12000, scoped, tag = 'internal scratch']
  %s0 = inlined_call_operand.hbm [shape: f32[16,128], index: 0, kind: input, shape index: {}]
  %s1 = inlined_call_operand.hbm [shape: f32[16,128], index: 1, kind: input, shape index: {}]
  %s2 = inlined_call_operand.hbm [shape: f32[8,128], index: 2, kind: output, shape index: {}]
  %s3 = sld [smem:[#allocation0]]
  $region34: #{tpu_custom_call.1} parent=0
    _
  %s5 = ssub.s32 1, %s3
  %s6 = scalar_select 0, %s5, %s3
  $region1: #{tpu_custom_call.1} parent=0
    #allocation2 [shape = 'u8[8192]{0}', space=vmem, size = 0x2000, scoped, tag = 'input window, operand 0, single buffered']
    #allocation3 [shape = 's32[1]{0}', space=sflag, size = 0x4, scoped, tag = 'scoped memory for tpu_custom_call.1']
    #allocation4 [shape = 's32[1]{0}', space=sflag, size = 0x4, scoped, tag = 'scoped memory for tpu_custom_call.1']
    #allocation5 [shape = 'u8[8192]{0}', space=vmem, size = 0x2000, scoped, tag = 'input window, operand 1, single buffered']
    #allocation6 [shape = 's32[1]{0}', space=sflag, size = 0x4, scoped, tag = 'scoped memory for tpu_custom_call.1']
    #allocation7 [shape = 'u8[4096]{0}', space=vmem, size = 0x1000, scoped, tag = 'output window, operand 0, single buffered']
    %7 = vsyncpa [#allocation3], 0
    %8 = vsyncpa [#allocation6], 0
    %9 = vsyncpa [#allocation4], 0
    // Predicated region
    $region2: #{tpu_custom_call.1} parent=1 // pred_check
      _
    $region3: #{tpu_custom_call.1} parent=1 // pred_check_branch
      %11 = sbr.rel (0) target = $region5
    $region4: #{tpu_custom_call.1} parent=1 // pred_region
      %s12 = sadd.s32 0, 0
      %p13 = scmp.lt.s32.totalorder %s12, 0
      %s14 = scalar_select %p13, %s12, 0
      %s15 = smul.u32 2, %s14
      %s17 = ssub.s32 256, 256
      %18 = vsyncadd [#allocation3], %s17
      %s19 = smul.addr %s15, 128
      %s20 = scalar_lea.hbm %s0, %s19
      %s21 = sshll.u32 [#allocation2], 4
      %s22 = int_to_ptr.vmem [resolvable:$true] %s21
      %27 = dma.hbm_to_vmem [thread:$0]  %s20, 256, %s22, [#allocation3], 128, 128, 8
    $region5: #{tpu_custom_call.1} parent=1 // pred_fallthru
      _
    // Predicated region
    $region6: #{tpu_custom_call.1} parent=1 // pred_check
      _
    $region7: #{tpu_custom_call.1} parent=1 // pred_check_branch
      %29 = sbr.rel (0) target = $region9
    $region8: #{tpu_custom_call.1} parent=1 // pred_region
      %s30 = sadd.s32 0, 0
      %p31 = scmp.lt.s32.totalorder %s30, 0
      %s32 = scalar_select %p31, %s30, 0
      %s33 = smul.u32 2, %s32
      %s35 = ssub.s32 256, 256
      %36 = vsyncadd [#allocation6], %s35
      %s37 = smul.addr %s33, 128
      %s38 = scalar_lea.hbm %s1, %s37
      %s39 = sshll.u32 [#allocation5], 4
      %s40 = int_to_ptr.vmem [resolvable:$true] %s39
      %45 = dma.hbm_to_vmem [thread:$0]  %s38, 256, %s40, [#allocation6], 128, 128, 8
    $region9: #{tpu_custom_call.1} parent=1 // pred_fallthru
      _
    // Predicated region
    $region10: #{tpu_custom_call.1} parent=1 // pred_check
      _
    $region11: #{tpu_custom_call.1} parent=1 // pred_check_branch
      %47 = sbr.rel (0) target = $region13
    $region12: #{tpu_custom_call.1} parent=1 // pred_region
      %48 = dma.done [#allocation3], 256
    $region13: #{tpu_custom_call.1} parent=1 // pred_fallthru
      _
    // Predicated region
    $region14: #{tpu_custom_call.1} parent=1 // pred_check
      _
    $region15: #{tpu_custom_call.1} parent=1 // pred_check_branch
      %50 = sbr.rel (0) target = $region17
    $region16: #{tpu_custom_call.1} parent=1 // pred_region
      %51 = dma.done [#allocation6], 256
    $region17: #{tpu_custom_call.1} parent=1 // pred_fallthru
      _
    %s52 = sadd.s32 0, 0
    %p53 = scmp.lt.s32.totalorder %s52, 0
    %s54 = scalar_select %p53, %s52, 0
    %s55 = smul.u32 2, %s54
    %s56 = sadd.s32 0, 0
    %p57 = scmp.lt.s32.totalorder %s56, 0
    %s58 = scalar_select %p57, %s56, 0
    %s59 = smul.u32 2, %s58
    %s60 = sadd.s32 0, 0
    %p61 = scmp.eq.s32.totalorder 0, 0
    // Predicated region
    $region18: #{tpu_custom_call.1} parent=1 // pred_check
      %p62 = pneg %p61
    $region19: #{tpu_custom_call.1} parent=1 // pred_check_branch
      %64 = sbr.rel (%p62) target = $region21
    $region20: #{tpu_custom_call.1} parent=1 // pred_region
      %65 = vst [vmem:[#allocation7] sm:$0xff] 0.0
    $region21: #{tpu_custom_call.1} parent=1 // pred_fallthru
      _
    %p66 = scmp.lt.s32.totalorder %s60, 1
    // Predicated region
    $region22: #{tpu_custom_call.1} parent=1 // pred_check
      %p67 = pneg %p66
    $region23: #{tpu_custom_call.1} parent=1 // pred_check_branch
      %69 = sbr.rel (%p67) target = $region25
    $region24: #{tpu_custom_call.1} parent=1 // pred_region
      %v70 = vld [vmem:[#allocation2] sm:$0xff]
      %v71 = vld [vmem:[#allocation2 + $0x8] sm:$0xff]
      %v72 = vld [vmem:[#allocation5] sm:$0xff]
      %v73 = vld [vmem:[#allocation5 + $0x8] sm:$0xff]
      %v74 = vsub.f32 %v70, %v72
      %v75 = vsub.f32 %v71, %v73
      %v76 = vmul.f32 %v74, %v74
      %v77 = vmul.f32 %v75, %v75
      %v78 = vadd.f32 %v76, 1e-06
      %v79 = vadd.f32 %v77, 1e-06
      %v80 = vrsqrt.pop %v78
      %v81 = vmul.f32 %v78, %v80
      %vm82 = vcmp.eq.f32.partialorder %v78, inf
      %v83 = vsel %vm82, %v78, %v81
      %vm84 = vcmp.eq.f32.partialorder %v78, 0.0
      %v85 = vand.u32 %v78, 2147483648
      %v86 = vsel %vm84, %v85, %v83
      %v87 = vrsqrt.pop %v79
      %v88 = vmul.f32 %v79, %v87
      %vm89 = vcmp.eq.f32.partialorder %v79, inf
      %v90 = vsel %vm89, %v79, %v88
      %vm91 = vcmp.eq.f32.partialorder %v79, 0.0
      %v92 = vand.u32 %v79, 2147483648
      %v93 = vsel %vm91, %v92, %v90
      %v94 = vld [vmem:[#allocation7] sm:$0xff]
      %v95 = vadd.f32 %v86, %v93
      %v96 = vadd.f32 %v94, %v95
      %97 = vst [vmem:[#allocation7] sm:$0xff] %v96
    $region25: #{tpu_custom_call.1} parent=1 // pred_fallthru
      _
    // Predicated region
    $region26: #{tpu_custom_call.1} parent=1 // pred_check
      _
    $region27: #{tpu_custom_call.1} parent=1 // pred_check_branch
      %99 = sbr.rel (0) target = $region29
    $region28: #{tpu_custom_call.1} parent=1 // pred_region
      %s101 = ssub.s32 128, 128
      %102 = vsyncadd [#allocation4], %s101
      %s104 = sshll.u32 [#allocation7], 4
      %s105 = int_to_ptr.vmem [resolvable:$true] %s104
      %107 = dma.vmem_to_hbm [thread:$0]  %s105, 128, %s2, [#allocation4]
    $region29: #{tpu_custom_call.1} parent=1 // pred_fallthru
      _
    // Predicated region
    $region30: #{tpu_custom_call.1} parent=1 // pred_check
      _
    $region31: #{tpu_custom_call.1} parent=1 // pred_check_branch
      %109 = sbr.rel (0) target = $region33
    $region32: #{tpu_custom_call.1} parent=1 // pred_region
      %110 = dma.done [#allocation4], 128
    $region33: #{tpu_custom_call.1} parent=1 // pred_fallthru
      _
    %111 = vsyncpa [#allocation3], 1
    %112 = vsyncpa [#allocation6], 1
    %113 = vsyncpa [#allocation4], 1

</llo_original>
